<compile_context>
chip_gen: v5e
topology: v5e:2x2
jax: 0.10.0
libtpu: 0.0.40
codegen_flags: <defaults>
</compile_context>

<pallas_src>
import jax
import jax.numpy as jnp
from jax.experimental import pallas as pl
from jax.experimental.pallas import tpu as pltpu


def _round_up(x, m):
    return ((x + m - 1) // m) * m


def qvalue_kernel(state_ref, action_ref, w1s_ref, w1a_ref, b1_ref, w2_ref,
                  b2_ref, o_ref):
    # fc1 with the concat fused: (TB,S)@(S,H) + (TB,A)@(A,H) + (1,H)
    h = jnp.dot(state_ref[...], w1s_ref[...],
                preferred_element_type=jnp.float32)
    h = h + jnp.dot(action_ref[...], w1a_ref[...],
                    preferred_element_type=jnp.float32)
    h = h + b1_ref[...]
    # leaky_relu (negative_slope=0.01) as a single vmax
    h = jnp.maximum(h, 0.01 * h)
    # fc2: (TB,H) @ (H,1).  Contraction over the lhs' last axis is MXU-native,
    # so h is never relaid out; the (TB,1) output column is a negligible
    # fraction of HBM traffic.
    q = jnp.dot(h, w2_ref[...], preferred_element_type=jnp.float32)
    o_ref[...] = q + b2_ref[0, 0]          # b2 read as a scalar from SMEM


def prepare_params(w1, b1, w2, b2, state_feat):
    """One-time parameter plumbing, hoisted out of the forward path.

    w1: (in_dim, hidden) -- transposed vs. PyTorch's (out, in) -- split so the
    torch.cat fuses into two in-kernel dots.
    """
    in_dim, hidden = w1.shape
    w1_s = jnp.asarray(w1[:state_feat, :], jnp.float32)
    w1_a = jnp.asarray(w1[state_feat:, :], jnp.float32)
    b1_row = jnp.asarray(b1, jnp.float32).reshape(1, hidden)
    w2_col = jnp.asarray(w2, jnp.float32).reshape(hidden, 1)
    b2_s = jnp.asarray(b2, jnp.float32).reshape(1, 1)
    return (w1_s, w1_a, b1_row, w2_col, b2_s)


def qvalue_forward(state, action, params, *, block_b=8192):
    w1_s, w1_a, b1_row, w2_col, b2_s = params
    B, s_feat = state.shape
    a_feat = action.shape[1]
    hidden = b1_row.shape[1]
    in_dim = s_feat + a_feat

    # Pad only to a sublane multiple of 8 (correctness of the (8,*) tiling for
    # tiny/odd batches); typical batch sizes hit the no-copy path.
    b_al = _round_up(B, 8)
    if b_al != B:
        state = jnp.pad(state, ((0, b_al - B), (0, 0)))
        action = jnp.pad(action, ((0, b_al - B), (0, 0)))

    # Batch tile: large enough to be HBM-streaming (not grid-step-overhead)
    # bound, capped so the grid has >= 2 steps (both v7x TensorCores busy).
    # Only sublane (8) alignment is needed since the output is a (tb,1) column.
    tb = max(8, min(block_b, _round_up(pl.cdiv(b_al, 2), 8)))
    grid = (pl.cdiv(b_al, tb),)

    # Lane-padded, double-buffered tiles: state/action/out ~ tb*512 B each per
    # buffer.  Set the scoped-VMEM limit explicitly, leaving headroom under
    # v7x's 64 MiB physical VMEM.
    vmem_limit = int(min(3 * 2 * tb * 512 + (8 << 20), 56 << 20))

    flops = B * (2 * in_dim * hidden + 2 * hidden + 3 * hidden)
    bytes_accessed = 4 * (B * (in_dim + 1)                 # activations + q
                          + in_dim * hidden + 2 * hidden + 1)

    out = pl.pallas_call(
        qvalue_kernel,
        out_shape=jax.ShapeDtypeStruct((b_al, 1), jnp.float32),
        grid=grid,
        in_specs=[
            pl.BlockSpec((tb, s_feat), lambda i: (i, 0)),        # state tile
            pl.BlockSpec((tb, a_feat), lambda i: (i, 0)),        # action tile
            pl.BlockSpec((s_feat, hidden), lambda i: (0, 0)),    # w1_s
            pl.BlockSpec((a_feat, hidden), lambda i: (0, 0)),    # w1_a
            pl.BlockSpec((1, hidden), lambda i: (0, 0)),         # b1
            pl.BlockSpec((hidden, 1), lambda i: (0, 0)),         # w2
            pl.BlockSpec(memory_space=pltpu.MemorySpace.SMEM),   # b2 scalar
        ],
        out_specs=pl.BlockSpec((tb, 1), lambda i: (i, 0)),
        compiler_params=pltpu.CompilerParams(
            dimension_semantics=("parallel",),
            vmem_limit_bytes=vmem_limit),
        cost_estimate=pl.CostEstimate(
            flops=flops, transcendentals=0, bytes_accessed=bytes_accessed),
    )(state, action, w1_s, w1_a, b1_row, w2_col, b2_s)

    return out[:B] if b_al != B else out


qvalue_apply = jax.jit(qvalue_forward, static_argnames=("block_b",))


def init_params(key, state_dim, hidden_dim, action_dim, uav_num):
    in_dim = state_dim * uav_num + action_dim
    k1, k2, k3, k4 = jax.random.split(key, 4)
    # fc1.weight.data.normal_(0, 0.1); bias keeps default U(-1/sqrt(fan_in), +)
    w1 = 0.1 * jax.random.normal(k1, (in_dim, hidden_dim), jnp.float32)
    b1 = jax.random.uniform(
        k2, (1, hidden_dim), jnp.float32,
        minval=-1.0 / jnp.sqrt(in_dim), maxval=1.0 / jnp.sqrt(in_dim))
    # fc2.weight.data.normal_(0, 0.1)
    w2 = 0.1 * jax.random.normal(k3, (hidden_dim, 1), jnp.float32)
    b2 = jax.random.uniform(
        k4, (1, 1), jnp.float32,
        minval=-1.0 / jnp.sqrt(hidden_dim), maxval=1.0 / jnp.sqrt(hidden_dim))
    return w1, b1, w2, b2


if __name__ == "__main__":
    # small shapes consistent with the module
    B, state_dim, uav_num, action_dim, hidden_dim = 2, 8, 2, 4, 32

    key = jax.random.PRNGKey(0)
    k_s, k_a, k_p = jax.random.split(key, 3)

    state = jax.random.normal(k_s, (B, state_dim * uav_num), jnp.float32)
    action = jax.random.normal(k_a, (B, action_dim), jnp.float32)
    w1, b1, w2, b2 = init_params(k_p, state_dim, hidden_dim, action_dim,
                                 uav_num)
    params = prepare_params(w1, b1, w2, b2, state_dim * uav_num)

    out = qvalue_apply(state, action, params)
    out = jax.block_until_ready(out)

    # pure-JAX reference check (matches the PyTorch forward)
    x = jnp.concatenate([state, action], axis=1)
    h = x @ w1 + b1
    h = jnp.where(h > 0, h, 0.01 * h)
    ref = h @ w2 + b2
    assert out.shape == (B, 1)
    assert jnp.allclose(out, ref, atol=1e-5), (out, ref)

    print("KERNEL_OK")
</pallas_src>

<mosaic_0001>
module attributes {stable_mosaic.version = 11 : i64} {
  func.func @qvalue_kernel(%arg0: i32, %arg1: memref<8x16xf32, #tpu.memory_space<vmem>>, %arg2: memref<8x4xf32, #tpu.memory_space<vmem>>, %arg3: memref<16x32xf32, #tpu.memory_space<vmem>>, %arg4: memref<4x32xf32, #tpu.memory_space<vmem>>, %arg5: memref<1x32xf32, #tpu.memory_space<vmem>>, %arg6: memref<32x1xf32, #tpu.memory_space<vmem>>, %arg7: memref<1x1xf32, #tpu.memory_space<smem>>, %arg8: memref<8x1xf32, #tpu.memory_space<vmem>>) attributes {dimension_semantics = [#tpu.dimension_semantics<parallel>], iteration_bounds = array<i64: 1>, scalar_prefetch = 0 : i64, scratch_operands = 0 : i64, tpu.core_type = #tpu.core_type<tc>, window_params = [{transform_indices = @transform_0, window_bounds = array<i64: 8, 16>}, {transform_indices = @transform_1, window_bounds = array<i64: 8, 4>}, {pipeline_mode = #tpu.pipeline_mode<synchronous>, transform_indices = @transform_2, window_bounds = array<i64: 16, 32>}, {pipeline_mode = #tpu.pipeline_mode<synchronous>, transform_indices = @transform_3, window_bounds = array<i64: 4, 32>}, {pipeline_mode = #tpu.pipeline_mode<synchronous>, transform_indices = @transform_4, window_bounds = array<i64: 1, 32>}, {pipeline_mode = #tpu.pipeline_mode<synchronous>, transform_indices = @transform_5, window_bounds = array<i64: 32, 1>}, {transform_indices = @transform_6, window_bounds = array<i64: 1, 1>}, {transform_indices = @transform_7, window_bounds = array<i64: 8, 1>}]} {
    %c0 = arith.constant 0 : index
    %c0_0 = arith.constant 0 : index
    %0 = vector.load %arg1[%c0, %c0_0] : memref<8x16xf32, #tpu.memory_space<vmem>>, vector<8x16xf32>
    %c0_1 = arith.constant 0 : index
    %c0_2 = arith.constant 0 : index
    %1 = vector.load %arg3[%c0_1, %c0_2] : memref<16x32xf32, #tpu.memory_space<vmem>>, vector<16x32xf32>
    %cst = arith.constant dense<0.000000e+00> : vector<8x32xf32>
    %2 = tpu.matmul %0, %1, %cst {dimension_numbers = #tpu.dot_dimension_numbers<[1], [0], [0], [1], [0, 0, 1, 1], [], []>} : vector<8x16xf32>, vector<16x32xf32>, vector<8x32xf32> -> vector<8x32xf32>
    %c0_3 = arith.constant 0 : index
    %c0_4 = arith.constant 0 : index
    %3 = vector.load %arg2[%c0_3, %c0_4] : memref<8x4xf32, #tpu.memory_space<vmem>>, vector<8x4xf32>
    %c0_5 = arith.constant 0 : index
    %c0_6 = arith.constant 0 : index
    %4 = vector.load %arg4[%c0_5, %c0_6] : memref<4x32xf32, #tpu.memory_space<vmem>>, vector<4x32xf32>
    %cst_7 = arith.constant dense<0.000000e+00> : vector<8x32xf32>
    %5 = tpu.matmul %3, %4, %cst_7 {dimension_numbers = #tpu.dot_dimension_numbers<[1], [0], [0], [1], [0, 0, 1, 1], [], []>} : vector<8x4xf32>, vector<4x32xf32>, vector<8x32xf32> -> vector<8x32xf32>
    %6 = arith.addf %2, %5 : vector<8x32xf32>
    %c0_8 = arith.constant 0 : index
    %c0_9 = arith.constant 0 : index
    %7 = vector.load %arg5[%c0_8, %c0_9] : memref<1x32xf32, #tpu.memory_space<vmem>>, vector<1x32xf32>
    %8 = vector.broadcast %7 : vector<1x32xf32> to vector<8x32xf32>
    %9 = arith.addf %6, %8 : vector<8x32xf32>
    %cst_10 = arith.constant 0.00999999977 : f32
    %10 = vector.broadcast %cst_10 : f32 to vector<8x32xf32>
    %11 = arith.mulf %10, %9 : vector<8x32xf32>
    %12 = arith.maximumf %9, %11 : vector<8x32xf32>
    %c0_11 = arith.constant 0 : index
    %c0_12 = arith.constant 0 : index
    %13 = vector.load %arg6[%c0_11, %c0_12] : memref<32x1xf32, #tpu.memory_space<vmem>>, vector<32x1xf32>
    %cst_13 = arith.constant dense<0.000000e+00> : vector<8x1xf32>
    %14 = tpu.matmul %12, %13, %cst_13 {dimension_numbers = #tpu.dot_dimension_numbers<[1], [0], [0], [1], [0, 0, 1, 1], [], []>} : vector<8x32xf32>, vector<32x1xf32>, vector<8x1xf32> -> vector<8x1xf32>
    %c0_14 = arith.constant 0 : index
    %c0_15 = arith.constant 0 : index
    %15 = memref.load %arg7[%c0_14, %c0_15] : memref<1x1xf32, #tpu.memory_space<smem>>
    %16 = vector.broadcast %15 : f32 to vector<8x1xf32>
    %17 = arith.addf %14, %16 : vector<8x1xf32>
    %c0_16 = arith.constant 0 : index
    %c0_17 = arith.constant 0 : index
    %18 = vector.load %arg8[%c0_16, %c0_17] : memref<8x1xf32, #tpu.memory_space<vmem>>, vector<8x1xf32>
    tpu.vector_store %arg8[%c0_16, %c0_17], %17 {strides = array<i32>} : memref<8x1xf32, #tpu.memory_space<vmem>>, vector<8x1xf32>,
    return
  }
  func.func @transform_0(%arg0: i32) -> (i32, i32) {
    %c0_i32 = arith.constant 0 : i32
    %c0_i32_0 = arith.constant 0 : i32
    return %arg0, %c0_i32 : i32, i32
  }
  func.func @transform_1(%arg0: i32) -> (i32, i32) {
    %c0_i32 = arith.constant 0 : i32
    %c0_i32_0 = arith.constant 0 : i32
    return %arg0, %c0_i32 : i32, i32
  }
  func.func @transform_2(%arg0: i32) -> (i32, i32) {
    %c0_i32 = arith.constant 0 : i32
    %c0_i32_0 = arith.constant 0 : i32
    %c0_i32_1 = arith.constant 0 : i32
    return %c0_i32, %c0_i32_0 : i32, i32
  }
  func.func @transform_3(%arg0: i32) -> (i32, i32) {
    %c0_i32 = arith.constant 0 : i32
    %c0_i32_0 = arith.constant 0 : i32
    %c0_i32_1 = arith.constant 0 : i32
    return %c0_i32, %c0_i32_0 : i32, i32
  }
  func.func @transform_4(%arg0: i32) -> (i32, i32) {
    %c0_i32 = arith.constant 0 : i32
    %c0_i32_0 = arith.constant 0 : i32
    %c0_i32_1 = arith.constant 0 : i32
    return %c0_i32, %c0_i32_0 : i32, i32
  }
  func.func @transform_5(%arg0: i32) -> (i32, i32) {
    %c0_i32 = arith.constant 0 : i32
    %c0_i32_0 = arith.constant 0 : i32
    %c0_i32_1 = arith.constant 0 : i32
    return %c0_i32, %c0_i32_0 : i32, i32
  }
  func.func @transform_6(%arg0: i32) -> (i32, i32) {
    %c0_i32 = arith.constant 0 : i32
    %c0_i32_0 = arith.constant 0 : i32
    %c0_i32_1 = arith.constant 0 : i32
    return %c0_i32, %c0_i32_0 : i32, i32
  }
  func.func @transform_7(%arg0: i32) -> (i32, i32) {
    %c0_i32 = arith.constant 0 : i32
    %c0_i32_0 = arith.constant 0 : i32
    return %arg0, %c0_i32 : i32, i32
  }
}

</mosaic_0001>

<llo_original>
// kernel: qvalue_forward.1
$region0: #{qvalue_forward.1}
  #allocation0 [shape = 'u32[]', space=smem, size = 0x4, offset = 0x4, fixed_abs, tag = 'smem constant byte address 0x4 - core index']
  #allocation1 [shape = 'u32[72,128]{1,0:T(1,128)}', space=vmem, size = 0x9000, scoped, tag = 'internal scratch']
  #allocation2 [shape = 'f32[1,1]{1,0:T(1,128)S(6)}', space=smem, size = 0x200, scoped, tag = 'scoped memory for qvalue_forward.1']
  %s0 = inlined_call_operand.vmem [shape: f32[8,16], index: 0, kind: input, shape index: {}]
  %s1 = inlined_call_operand.vmem [shape: f32[8,4], index: 1, kind: input, shape index: {}]
  %s2 = inlined_call_operand.vmem [shape: f32[16,32], index: 2, kind: input, shape index: {}]
  %s3 = inlined_call_operand.vmem [shape: f32[4,32], index: 3, kind: input, shape index: {}]
  %s4 = inlined_call_operand.vmem [shape: f32[1,32], index: 4, kind: input, shape index: {}]
  %s5 = inlined_call_operand.vmem [shape: f32[32,1], index: 5, kind: input, shape index: {}]
  %s6 = inlined_call_operand.<no memory space> [shape: f32[1,1], index: 6, kind: input, shape index: {}]
  %s7 = inlined_call_operand.vmem [shape: f32[8,1], index: 7, kind: output, shape index: {}]
  %s8 = sld [smem:[#allocation0]]
  $region38: #{qvalue_forward.1} parent=0
    _
  %s10 = ssub.s32 1, %s8
  %s11 = scalar_select 0, %s10, %s8
  %12 = sst [smem:[#allocation2]] %s6
  // Predicated region
  $region2: #{qvalue_forward.1} parent=0 // pred_check
    _
  $region3: #{qvalue_forward.1} parent=0 // pred_check_branch
    %14 = sbr.rel (0) target = $region5
  $region4: #{qvalue_forward.1} parent=0 // pred_region
    _
  $region5: #{qvalue_forward.1} parent=0 // pred_fallthru
    _
  // Predicated region
  $region6: #{qvalue_forward.1} parent=0 // pred_check
    _
  $region7: #{qvalue_forward.1} parent=0 // pred_check_branch
    %16 = sbr.rel (0) target = $region9
  $region8: #{qvalue_forward.1} parent=0 // pred_region
    _
  $region9: #{qvalue_forward.1} parent=0 // pred_fallthru
    _
  // Predicated region
  $region10: #{qvalue_forward.1} parent=0 // pred_check
    _
  $region11: #{qvalue_forward.1} parent=0 // pred_check_branch
    %18 = sbr.rel (0) target = $region13
  $region12: #{qvalue_forward.1} parent=0 // pred_region
    _
  $region13: #{qvalue_forward.1} parent=0 // pred_fallthru
    _
  // Predicated region
  $region14: #{qvalue_forward.1} parent=0 // pred_check
    _
  $region15: #{qvalue_forward.1} parent=0 // pred_check_branch
    %20 = sbr.rel (0) target = $region17
  $region16: #{qvalue_forward.1} parent=0 // pred_region
    _
  $region17: #{qvalue_forward.1} parent=0 // pred_fallthru
    _
  // Predicated region
  $region18: #{qvalue_forward.1} parent=0 // pred_check
    _
  $region19: #{qvalue_forward.1} parent=0 // pred_check_branch
    %22 = sbr.rel (0) target = $region21
  $region20: #{qvalue_forward.1} parent=0 // pred_region
    _
  $region21: #{qvalue_forward.1} parent=0 // pred_fallthru
    _
  // Predicated region
  $region22: #{qvalue_forward.1} parent=0 // pred_check
    _
  $region23: #{qvalue_forward.1} parent=0 // pred_check_branch
    %24 = sbr.rel (0) target = $region25
  $region24: #{qvalue_forward.1} parent=0 // pred_region
    _
  $region25: #{qvalue_forward.1} parent=0 // pred_fallthru
    _
  // Predicated region
  $region26: #{qvalue_forward.1} parent=0 // pred_check
    _
  $region27: #{qvalue_forward.1} parent=0 // pred_check_branch
    %26 = sbr.rel (0) target = $region29
  $region28: #{qvalue_forward.1} parent=0 // pred_region
    _
  $region29: #{qvalue_forward.1} parent=0 // pred_fallthru
    _
  %v27 = vld [vmem:[%s0] sm:$0xff]
  %v28 = vld [vmem:[%s2] sm:$0xff]
  %v29 = vld [vmem:[%s2 + $0x8] sm:$0xff]
  %v30 = vld [vmem:[%s1] sm:$0xff]
  %v31 = vld [vmem:[%s3] sm:$0xf]
  %vm32 = vcmask 31744
  %v34 = vsel %vm32, %v30, 0
  %vm36 = vcmask 1043456
  %v38 = vsel %vm36, %v31, 0
  %40 = vmatpush.msra.mxu0 0.0
  %41 = vmatpush.msra.mxu0 0.0
  %42 = vmatpush.msra.mxu0 0.0
  %43 = vmatpush.msra.mxu0 0.0
  %44 = vmatpush.msra.mxu0 0.0
  %45 = vmatpush.msra.mxu0 0.0
  %46 = vmatpush.msra.mxu0 0.0
  %47 = vmatpush.msra.mxu0 0.0
  %48 = vmatpush.msra.mxu0 0.0
  %49 = vmatpush.msra.mxu0 0.0
  %50 = vmatpush.msra.mxu0 0.0
  %51 = vmatpush.msra.mxu0 0.0
  %52 = vmatpush.msra.mxu0 0.0
  %53 = vmatpush.msra.mxu0 0.0
  %54 = vmatpush.msra.mxu0 0.0
  %55 = vmatpush.msra.mxu0 %v38
  %56 = vmatmul.f32.gmra.mxu0 %v34
  %v57 = vpop.f32.mrf.mxu0
  %v58 = vadd.f32 0.0, %v57
  %59 = vdwg.mxu0
  %vm60 = vcmask 130048
  %v62 = vsel %vm60, %v27, 0
  %64 = vmatpush.msra.mxu0 0.0
  %65 = vmatpush.msra.mxu0 0.0
  %66 = vmatpush.msra.mxu0 0.0
  %67 = vmatpush.msra.mxu0 0.0
  %68 = vmatpush.msra.mxu0 0.0
  %69 = vmatpush.msra.mxu0 0.0
  %70 = vmatpush.msra.mxu0 0.0
  %71 = vmatpush.msra.mxu0 0.0
  %72 = vmatpush.msra.mxu0 0.0
  %73 = vmatpush.msra.mxu0 0.0
  %74 = vmatpush.msra.mxu0 0.0
  %75 = vmatpush.msra.mxu0 0.0
  %76 = vmatpush.msra.mxu0 0.0
  %77 = vmatpush.msra.mxu0 0.0
  %78 = vmatpush.msra.mxu0 %v29
  %79 = vmatpush.msra.mxu0 %v28
  %80 = vmatmul.f32.gmra.mxu0 %v62
  %v81 = vpop.f32.mrf.mxu0
  %v82 = vadd.f32 %v58, %v81
  %83 = vdwg.mxu0
  %v84 = vld [vmem:[%s4] sm:$0x1]
  %v86 = vperm.slane %v84, 0
  %v88 = vadd.f32 %v82, %v86
  %v89 = vmul.f32 %v88, 0.01
  %v90 = vmax.f32 %v88, %v89
  %v91 = vld [vmem:[%s5] sm:$0xff]
  %v92 = vld [vmem:[%s5 + $0x8] sm:$0xff]
  %v93 = vld [vmem:[%s5 + $0x10] sm:$0xff]
  %v94 = vld [vmem:[%s5 + $0x18] sm:$0xff]
  %s95 = sld [smem:[#allocation2]]
  %v96 = vstv %s95
  %vm97 = vcmask 261120
  %v99 = vsel %vm97, %v90, 0
  %101 = vmatpush.msra.mxu0 0.0
  %102 = vmatpush.msra.mxu0 0.0
  %103 = vmatpush.msra.mxu0 0.0
  %104 = vmatpush.msra.mxu0 0.0
  %105 = vmatpush.msra.mxu0 0.0
  %106 = vmatpush.msra.mxu0 0.0
  %107 = vmatpush.msra.mxu0 0.0
  %108 = vmatpush.msra.mxu0 0.0
  %109 = vmatpush.msra.mxu0 0.0
  %110 = vmatpush.msra.mxu0 0.0
  %111 = vmatpush.msra.mxu0 0.0
  %112 = vmatpush.msra.mxu0 0.0
  %113 = vmatpush.msra.mxu0 %v94
  %114 = vmatpush.msra.mxu0 %v93
  %115 = vmatpush.msra.mxu0 %v92
  %116 = vmatpush.msra.mxu0 %v91
  %117 = vmatmul.f32.gmra.mxu0 %v99
  %v118 = vpop.f32.mrf.mxu0
  %v119 = vadd.f32 %v96, %v118
  %120 = vdwg.mxu0
  %vm121 = vcmask 7168
  %122 = vst.msk [vmem:[%s7] sm:$0xff] %vm121, %v119
  // Predicated region
  $region30: #{qvalue_forward.1} parent=0 // pred_check
    _
  $region31: #{qvalue_forward.1} parent=0 // pred_check_branch
    %124 = sbr.rel (0) target = $region33
  $region32: #{qvalue_forward.1} parent=0 // pred_region
    _
  $region33: #{qvalue_forward.1} parent=0 // pred_fallthru
    _
  // Predicated region
  $region34: #{qvalue_forward.1} parent=0 // pred_check
    _
  $region35: #{qvalue_forward.1} parent=0 // pred_check_branch
    %126 = sbr.rel (0) target = $region37
  $region36: #{qvalue_forward.1} parent=0 // pred_region
    _
  $region37: #{qvalue_forward.1} parent=0 // pred_fallthru
    _

</llo_original>
